<compile_context>
chip_gen: v7x
topology: tpu7x:2x2x1
jax: 0.10.0
libtpu: 0.0.40
codegen_flags: <defaults>
</compile_context>

<pallas_src>
import functools
import math

import jax
import jax.numpy as jnp
from jax.experimental import pallas as pl
from jax.experimental.pallas import tpu as pltpu

_LANE = 128
_SUBLANE = 8


def _round_up(x, m):
    return (x + m - 1) // m * m


def _silu(x):
    return x * jax.nn.sigmoid(x)


_ACTIVATIONS = {
    "relu": lambda v: jnp.maximum(v, 0.0),
    "leaky_relu": lambda v: jnp.where(v >= 0.0, v, 0.01 * v),
    "swish": _silu,
    "mish": lambda v: v * jnp.tanh(jax.nn.softplus(v)),
}


# ----------------------------------------------------------------------------
# Parameter slab layout / one-time packing
# ----------------------------------------------------------------------------
def _slab_layout(dims, lane):
    """Static (row_offset, weight_rows) per Linear layer inside the slab."""
    offs = []
    r = 0
    for i in range(len(dims) - 1):
        in_rows = _round_up(dims[i], _SUBLANE) if i == 0 else lane
        offs.append((r, in_rows))
        r += in_rows + _SUBLANE  # 8-row sublane-aligned block holding the bias
    return offs, r


def pack_mlp_params(weights, biases, dims, lane):
    """Pack all weights+biases into ONE lane-aligned f32 slab (done once).

    Layer i:
      rows [off, off+in_rows)      : W_i^T  (in_i, out_i), zero-padded
      row  off+in_rows             : bias_i (out_i,),      zero-padded
    """
    offs, total_rows = _slab_layout(dims, lane)
    slab = jnp.zeros((total_rows, lane), jnp.float32)
    for i, (w, b) in enumerate(zip(weights, biases)):
        out_i, in_i = w.shape
        off, in_rows = offs[i]
        slab = slab.at[off:off + in_i, :out_i].set(jnp.asarray(w, jnp.float32).T)
        slab = slab.at[off + in_rows, :out_i].set(jnp.asarray(b, jnp.float32))
    return slab


# ----------------------------------------------------------------------------
# Kernel
# ----------------------------------------------------------------------------
def _make_mlp_kernel(dims, lane, activation, squash):
    """Fused MLP kernel: (x_tile_ref, param_slab_ref, out_tile_ref)."""
    num_linear = len(dims) - 1
    offs, _ = _slab_layout(dims, lane)

    def kernel(x_ref, p_ref, o_ref):
        h = x_ref[...].astype(jnp.float32)
        for i in range(num_linear):
            off, in_rows = offs[i]
            # Static, tile-aligned slices of the resident parameter slab.
            w = p_ref[off:off + in_rows, :]                  # (in_rows, lane)
            b = p_ref[off + in_rows:off + in_rows + 1, :]    # (1, lane)
            h = jnp.dot(h, w, preferred_element_type=jnp.float32) + b
            if i < num_linear - 1:
                h = activation(h)
        if squash:
            h = jnp.tanh(h)
        o_ref[...] = h.astype(o_ref.dtype)

    return kernel


# ----------------------------------------------------------------------------
# Jitted forward wrapper
# ----------------------------------------------------------------------------
@functools.partial(jax.jit,
                   static_argnames=("dims", "activation_function", "squash"))
def mlp_forward(x, param_slab, *, dims, activation_function="swish",
                squash=False):
    """Run the fused MLP Pallas kernel.

    x          : (B, input_dim) float32
    param_slab : output of pack_mlp_params (packed once, outside the hot path)
    dims       : static tuple (input_dim, *hidden_layers, output_dim)
    """
    if activation_function not in _ACTIVATIONS:
        raise NotImplementedError(activation_function)
    act = _ACTIVATIONS[activation_function]

    input_dim = dims[0]
    output_dim = dims[-1]
    lane = param_slab.shape[-1]

    batch = x.shape[0]
    d_in_p = _round_up(input_dim, _SUBLANE)

    # Batch tile: multiple of 8, large enough to amortize per-step overhead,
    # small enough to stay well inside VMEM on v7x (64 MiB physical).
    tm = min(512, _round_up(batch, _SUBLANE))
    b_pad = _round_up(batch, tm)

    # Zero-pad batch / feature dims (fuses inside this jit; no extra dispatch).
    x_p = jnp.pad(x.astype(jnp.float32),
                  ((0, b_pad - batch), (0, d_in_p - input_dim)))

    kernel = _make_mlp_kernel(dims, lane, act, squash)

    out_padded = pl.pallas_call(
        kernel,
        out_shape=jax.ShapeDtypeStruct((b_pad, lane), jnp.float32),
        grid=(b_pad // tm,),
        in_specs=[
            # Activations: tiled over the batch axis.
            pl.BlockSpec((tm, d_in_p), lambda i: (i, 0)),
            # Packed params: constant index_map -> DMA'd once, VMEM-resident.
            pl.BlockSpec(param_slab.shape, lambda i: (0, 0)),
        ],
        # Lane-dense (128-wide) output -> unmasked stores; sliced below.
        out_specs=pl.BlockSpec((tm, lane), lambda i: (i, 0)),
        compiler_params=pltpu.CompilerParams(
            # Batch axis is embarrassingly parallel: lets v7x split it across
            # its 2 TensorCores; harmless no-op on v5e/v6e.
            dimension_semantics=("parallel",),
        ),
    )(x_p, param_slab)

    return out_padded[:batch, :output_dim].astype(x.dtype)


# ----------------------------------------------------------------------------
# Deterministic parameter init (mimics PyTorch nn.Linear default: U(-k, k),
# k = 1/sqrt(fan_in)) and a pure-JAX reference for sanity checking.
# ----------------------------------------------------------------------------
def init_mlp_params(key, input_dim, hidden_layers, output_dim):
    dims = [input_dim] + list(hidden_layers) + [output_dim]
    weights, biases = [], []
    for i in range(len(dims) - 1):
        fan_in, fan_out = dims[i], dims[i + 1]
        k = 1.0 / math.sqrt(fan_in)
        key, kw, kb = jax.random.split(key, 3)
        w = jax.random.uniform(kw, (fan_out, fan_in), jnp.float32, -k, k)
        b = jax.random.uniform(kb, (fan_out,), jnp.float32, -k, k)
        weights.append(w)
        biases.append(b)
    return weights, biases


def mlp_reference(x, weights, biases, activation_function, squash):
    act = _ACTIVATIONS[activation_function]
    h = x
    n = len(weights)
    for i, (w, b) in enumerate(zip(weights, biases)):
        h = h @ w.T + b
        if i < n - 1:
            h = act(h)
    if squash:
        h = jnp.tanh(h)
    return h


# ----------------------------------------------------------------------------
if __name__ == "__main__":
    INPUT_DIM = 16
    HIDDEN_LAYERS = [32, 64]
    OUTPUT_DIM = 8
    ACTIVATION = "swish"
    SQUASH = True
    BATCH = 64

    dims = (INPUT_DIM, *HIDDEN_LAYERS, OUTPUT_DIM)

    key = jax.random.PRNGKey(0)
    key, kx = jax.random.split(key)
    x = jax.random.normal(kx, (BATCH, INPUT_DIM), jnp.float32)

    weights, biases = init_mlp_params(key, INPUT_DIM, HIDDEN_LAYERS, OUTPUT_DIM)

    # One-time packing (outside the hot path): single lane-aligned param slab.
    lane = max(_LANE, _round_up(max(dims[1:]), _LANE))
    param_slab = pack_mlp_params(weights, biases, dims, lane)

    out = mlp_forward(x, param_slab, dims=dims,
                      activation_function=ACTIVATION, squash=SQUASH)
    out = jax.block_until_ready(out)

    ref = mlp_reference(x, weights, biases, ACTIVATION, SQUASH)
    assert out.shape == (BATCH, OUTPUT_DIM), out.shape
    max_err = float(jnp.max(jnp.abs(out - ref)))
    assert jnp.allclose(out, ref, atol=1e-5, rtol=1e-5), max_err
    print("KERNEL_OK")
</pallas_src>

<mosaic_0001>
module attributes {stable_mosaic.version = 11 : i64} {
  func.func @kernel(%arg0: i32, %arg1: memref<64x16xf32, #tpu.memory_space<vmem>>, %arg2: memref<296x128xf32, #tpu.memory_space<vmem>>, %arg3: memref<64x128xf32, #tpu.memory_space<vmem>>) attributes {dimension_semantics = [#tpu.dimension_semantics<parallel>], iteration_bounds = array<i64: 1>, scalar_prefetch = 0 : i64, scratch_operands = 0 : i64, tpu.core_type = #tpu.core_type<tc>, window_params = [{transform_indices = @transform_0, window_bounds = array<i64: 64, 16>}, {pipeline_mode = #tpu.pipeline_mode<synchronous>, transform_indices = @transform_1, window_bounds = array<i64: 296, 128>}, {transform_indices = @transform_2, window_bounds = array<i64: 64, 128>}]} {
    %c0 = arith.constant 0 : index
    %c0_0 = arith.constant 0 : index
    %0 = vector.load %arg1[%c0, %c0_0] : memref<64x16xf32, #tpu.memory_space<vmem>>, vector<64x16xf32>
    %c0_1 = arith.constant 0 : index
    %c0_2 = arith.constant 0 : index
    %1 = vector.load %arg2[%c0_1, %c0_2] : memref<296x128xf32, #tpu.memory_space<vmem>>, vector<16x128xf32>
    %c16 = arith.constant 16 : index
    %c0_3 = arith.constant 0 : index
    %2 = vector.load %arg2[%c16, %c0_3] : memref<296x128xf32, #tpu.memory_space<vmem>>, vector<1x128xf32>
    %cst = arith.constant dense<0.000000e+00> : vector<64x128xf32>
    %3 = tpu.matmul %0, %1, %cst {dimension_numbers = #tpu.dot_dimension_numbers<[1], [0], [0], [1], [0, 0, 1, 1], [], []>} : vector<64x16xf32>, vector<16x128xf32>, vector<64x128xf32> -> vector<64x128xf32>
    %4 = vector.broadcast %2 : vector<1x128xf32> to vector<64x128xf32>
    %5 = arith.addf %3, %4 : vector<64x128xf32>
    %6 = arith.negf %5 : vector<64x128xf32>
    %7 = math.exp %6 : vector<64x128xf32>
    %cst_4 = arith.constant 1.000000e+00 : f32
    %8 = vector.broadcast %cst_4 : f32 to vector<64x128xf32>
    %9 = arith.addf %8, %7 : vector<64x128xf32>
    %10 = arith.divf %8, %9 : vector<64x128xf32>
    %11 = arith.mulf %5, %10 : vector<64x128xf32>
    %c24 = arith.constant 24 : index
    %c0_5 = arith.constant 0 : index
    %12 = vector.load %arg2[%c24, %c0_5] : memref<296x128xf32, #tpu.memory_space<vmem>>, vector<128x128xf32>
    %c152 = arith.constant 152 : index
    %c0_6 = arith.constant 0 : index
    %13 = vector.load %arg2[%c152, %c0_6] : memref<296x128xf32, #tpu.memory_space<vmem>>, vector<1x128xf32>
    %cst_7 = arith.constant dense<0.000000e+00> : vector<64x128xf32>
    %14 = tpu.matmul %11, %12, %cst_7 {dimension_numbers = #tpu.dot_dimension_numbers<[1], [0], [0], [1], [0, 0, 1, 1], [], []>} : vector<64x128xf32>, vector<128x128xf32>, vector<64x128xf32> -> vector<64x128xf32>
    %15 = vector.broadcast %13 : vector<1x128xf32> to vector<64x128xf32>
    %16 = arith.addf %14, %15 : vector<64x128xf32>
    %17 = arith.negf %16 : vector<64x128xf32>
    %18 = math.exp %17 : vector<64x128xf32>
    %cst_8 = arith.constant 1.000000e+00 : f32
    %19 = vector.broadcast %cst_8 : f32 to vector<64x128xf32>
    %20 = arith.addf %19, %18 : vector<64x128xf32>
    %21 = arith.divf %19, %20 : vector<64x128xf32>
    %22 = arith.mulf %16, %21 : vector<64x128xf32>
    %c160 = arith.constant 160 : index
    %c0_9 = arith.constant 0 : index
    %23 = vector.load %arg2[%c160, %c0_9] : memref<296x128xf32, #tpu.memory_space<vmem>>, vector<128x128xf32>
    %c288 = arith.constant 288 : index
    %c0_10 = arith.constant 0 : index
    %24 = vector.load %arg2[%c288, %c0_10] : memref<296x128xf32, #tpu.memory_space<vmem>>, vector<1x128xf32>
    %cst_11 = arith.constant dense<0.000000e+00> : vector<64x128xf32>
    %25 = tpu.matmul %22, %23, %cst_11 {dimension_numbers = #tpu.dot_dimension_numbers<[1], [0], [0], [1], [0, 0, 1, 1], [], []>} : vector<64x128xf32>, vector<128x128xf32>, vector<64x128xf32> -> vector<64x128xf32>
    %26 = vector.broadcast %24 : vector<1x128xf32> to vector<64x128xf32>
    %27 = arith.addf %25, %26 : vector<64x128xf32>
    %28 = math.tanh %27 : vector<64x128xf32>
    %c0_12 = arith.constant 0 : index
    %c0_13 = arith.constant 0 : index
    %29 = vector.load %arg3[%c0_12, %c0_13] : memref<64x128xf32, #tpu.memory_space<vmem>>, vector<64x128xf32>
    tpu.vector_store %arg3[%c0_12, %c0_13], %28 {strides = array<i32>} : memref<64x128xf32, #tpu.memory_space<vmem>>, vector<64x128xf32>,
    return
  }
  func.func @transform_0(%arg0: i32) -> (i32, i32) {
    %c0_i32 = arith.constant 0 : i32
    %c0_i32_0 = arith.constant 0 : i32
    return %arg0, %c0_i32 : i32, i32
  }
  func.func @transform_1(%arg0: i32) -> (i32, i32) {
    %c0_i32 = arith.constant 0 : i32
    %c0_i32_0 = arith.constant 0 : i32
    %c0_i32_1 = arith.constant 0 : i32
    return %c0_i32, %c0_i32_0 : i32, i32
  }
  func.func @transform_2(%arg0: i32) -> (i32, i32) {
    %c0_i32 = arith.constant 0 : i32
    %c0_i32_0 = arith.constant 0 : i32
    return %arg0, %c0_i32 : i32, i32
  }
}

</mosaic_0001>

<llo_original>
// kernel: mlp_forward.1
$region0: #{mlp_forward.1}
  #allocation0 [shape = 'u32[]', space=smem, size = 0x4, offset = 0x4, fixed_abs, tag = 'smem constant byte address 0x4 - core index']
  #allocation1 [shape = 'u32[144,128]{1,0:T(1,128)}', space=vmem, size = 0x12000, scoped, tag = 'internal scratch']
  %s0 = inlined_call_operand.vmem [shape: f32[64,16], index: 0, kind: input, shape index: {}]
  %s1 = inlined_call_operand.hbm [shape: f32[296,128], index: 1, kind: input, shape index: {}]
  %s2 = inlined_call_operand.vmem [shape: f32[64,128], index: 2, kind: output, shape index: {}]
  %s3 = sld [smem:[#allocation0]]
  $region22: #{mlp_forward.1} parent=0
    _
  %s5 = ssub.s32 1, %s3
  %s6 = scalar_select 0, %s5, %s3
  $region1: #{mlp_forward.1} parent=0
    #allocation2 [shape = 'u8[151552]{0}', space=vmem, size = 0x25000, scoped, tag = 'input window, operand 1, single buffered']
    #allocation3 [shape = 's32[1]{0}', space=sflag, size = 0x4, scoped, tag = 'scoped memory for mlp_forward.1']
    %7 = vsyncpa [#allocation3], 0
    // Predicated region
    $region2: #{mlp_forward.1} parent=1 // pred_check
      _
    $region3: #{mlp_forward.1} parent=1 // pred_check_branch
      %9 = sbr.rel (0) target = $region5
    $region4: #{mlp_forward.1} parent=1 // pred_region
      _
    $region5: #{mlp_forward.1} parent=1 // pred_fallthru
      _
    // Predicated region
    $region6: #{mlp_forward.1} parent=1 // pred_check
      _
    $region7: #{mlp_forward.1} parent=1 // pred_check_branch
      %11 = sbr.rel (0) target = $region9
    $region8: #{mlp_forward.1} parent=1 // pred_region
      %s13 = ssub.s32 4736, 4736
      %14 = vsyncadd [#allocation3], %s13
      %s15 = sshll.u32 [#allocation2], 4
      %s16 = int_to_ptr.vmem [resolvable:$true] %s15
      %21 = dma.hbm_to_vmem [thread:$0]  %s1, 4736, %s16, [#allocation3], 128, 128, 8
    $region9: #{mlp_forward.1} parent=1 // pred_fallthru
      _
    // Predicated region
    $region10: #{mlp_forward.1} parent=1 // pred_check
      _
    $region11: #{mlp_forward.1} parent=1 // pred_check_branch
      %23 = sbr.rel (0) target = $region13
    $region12: #{mlp_forward.1} parent=1 // pred_region
      %24 = dma.done [#allocation3], 4736
    $region13: #{mlp_forward.1} parent=1 // pred_fallthru
      _
    %v25 = vld [vmem:[%s0] sm:$0xff]
    %v26 = vld [vmem:[%s0 + $0x8] sm:$0xff]
    %v27 = vld [vmem:[%s0 + $0x10] sm:$0xff]
    %v28 = vld [vmem:[%s0 + $0x18] sm:$0xff]
    %v29 = vld [vmem:[%s0 + $0x20] sm:$0xff]
    %v30 = vld [vmem:[%s0 + $0x28] sm:$0xff]
    %v31 = vld [vmem:[%s0 + $0x30] sm:$0xff]
    %v32 = vld [vmem:[%s0 + $0x38] sm:$0xff]
    %v33 = vld [vmem:[#allocation2] sm:$0xff]
    %v34 = vld [vmem:[#allocation2 + $0x8] sm:$0xff]
    %v35 = vld [vmem:[#allocation2 + $0x10] sm:$0x1]
    %v36 = vlaneseq
    %v37 = vshrl.u32 %v36, 7
    %v38 = vsub.s32 0, %v37
    %v39 = vrot.slane %v35, %v38
    %vm40 = vcmask 130048
    %v42 = vsel %vm40, %v25, 0
    %v45 = vsel %vm40, %v26, 0
    %v48 = vsel %vm40, %v27, 0
    %v51 = vsel %vm40, %v28, 0
    %v54 = vsel %vm40, %v29, 0
    %v57 = vsel %vm40, %v30, 0
    %v60 = vsel %vm40, %v31, 0
    %v63 = vsel %vm40, %v32, 0
    %65 = vmatprep.subr.mxu0 0.0
    %66 = vmatpush1.msra.mxu0 %v33
    %67 = vmatprep.subr.mxu0 0.0
    %68 = vmatpush1.msra.mxu0 %v34
    %69 = vmatprep.subr.mxu0 0.0
    %70 = vmatpush1.msra.mxu0 0.0
    %71 = vmatprep.subr.mxu0 0.0
    %72 = vmatpush1.msra.mxu0 0.0
    %73 = vmatprep.subr.mxu0 0.0
    %74 = vmatpush1.msra.mxu0 0.0
    %75 = vmatprep.subr.mxu0 0.0
    %76 = vmatpush1.msra.mxu0 0.0
    %77 = vmatprep.subr.mxu0 0.0
    %78 = vmatpush1.msra.mxu0 0.0
    %79 = vmatprep.subr.mxu0 0.0
    %80 = vmatpush1.msra.mxu0 0.0
    %81 = vmatprep.subr.mxu0 0.0
    %82 = vmatpush1.msra.mxu0 0.0
    %83 = vmatprep.subr.mxu0 0.0
    %84 = vmatpush1.msra.mxu0 0.0
    %85 = vmatprep.subr.mxu0 0.0
    %86 = vmatpush1.msra.mxu0 0.0
    %87 = vmatprep.subr.mxu0 0.0
    %88 = vmatpush1.msra.mxu0 0.0
    %89 = vmatprep.subr.mxu0 0.0
    %90 = vmatpush1.msra.mxu0 0.0
    %91 = vmatprep.subr.mxu0 0.0
    %92 = vmatpush1.msra.mxu0 0.0
    %93 = vmatprep.subr.mxu0 0.0
    %94 = vmatpush1.msra.mxu0 0.0
    %95 = vmatprep.subr.mxu0 0.0
    %96 = vmatpush1.msra.mxu0 0.0
    %97 = vmatprep.subr.mxu0 0.0
    %98 = vmatpush1.msra.mxu0 0.0
    %99 = vmatprep.subr.mxu0 0.0
    %100 = vmatpush1.msra.mxu0 0.0
    %101 = vmatprep.subr.mxu0 0.0
    %102 = vmatpush1.msra.mxu0 0.0
    %103 = vmatprep.subr.mxu0 0.0
    %104 = vmatpush1.msra.mxu0 0.0
    %105 = vmatprep.subr.mxu0 0.0
    %106 = vmatpush1.msra.mxu0 0.0
    %107 = vmatprep.subr.mxu0 0.0
    %108 = vmatpush1.msra.mxu0 0.0
    %109 = vmatprep.subr.mxu0 0.0
    %110 = vmatpush1.msra.mxu0 0.0
    %111 = vmatprep.subr.mxu0 0.0
    %112 = vmatpush1.msra.mxu0 0.0
    %113 = vmatprep.subr.mxu0 0.0
    %114 = vmatpush1.msra.mxu0 0.0
    %115 = vmatprep.subr.mxu0 0.0
    %116 = vmatpush1.msra.mxu0 0.0
    %117 = vmatprep.subr.mxu0 0.0
    %118 = vmatpush1.msra.mxu0 0.0
    %119 = vmatprep.subr.mxu0 0.0
    %120 = vmatpush1.msra.mxu0 0.0
    %121 = vmatprep.subr.mxu0 0.0
    %122 = vmatpush1.msra.mxu0 0.0
    %123 = vmatprep.subr.mxu0 0.0
    %124 = vmatpush1.msra.mxu0 0.0
    %125 = vmatprep.subr.mxu0 0.0
    %126 = vmatpush1.msra.mxu0 0.0
    %127 = vmatprep.subr.mxu0 0.0
    %128 = vmatpush1.msra.mxu0 0.0
    %129 = vmatprep.mubr.f32.mxu0 0.0
    %130 = vmatmul.mubr.f32.gmra.mrb[0].mxu0 %v42
    %v131 = vpop.f32.mrb[0].mxu0
    %v132 = vadd.f32 %v39, %v131
    %v133 = vpop.f32.mrb[0].mxu0
    %134 = vmatprep.mubr.f32.mxu0 0.0
    %135 = vmatmul.mubr.f32.gmra.mrb[0].mxu0 %v45
    %v136 = vpop.f32.mrb[0].mxu0
    %v137 = vadd.f32 %v39, %v136
    %v138 = vpop.f32.mrb[0].mxu0
    %139 = vmatprep.mubr.f32.mxu0 0.0
    %140 = vmatmul.mubr.f32.gmra.mrb[0].mxu0 %v48
    %v141 = vpop.f32.mrb[0].mxu0
    %v142 = vadd.f32 %v39, %v141
    %v143 = vpop.f32.mrb[0].mxu0
    %144 = vmatprep.mubr.f32.mxu0 0.0
    %145 = vmatmul.mubr.f32.gmra.mrb[0].mxu0 %v51
    %v146 = vpop.f32.mrb[0].mxu0
    %v147 = vadd.f32 %v39, %v146
    %v148 = vpop.f32.mrb[0].mxu0
    %149 = vmatprep.mubr.f32.mxu0 0.0
    %150 = vmatmul.mubr.f32.gmra.mrb[0].mxu0 %v54
    %v151 = vpop.f32.mrb[0].mxu0
    %v152 = vadd.f32 %v39, %v151
    %v153 = vpop.f32.mrb[0].mxu0
    %154 = vmatprep.mubr.f32.mxu0 0.0
    %155 = vmatmul.mubr.f32.gmra.mrb[0].mxu0 %v57
    %v156 = vpop.f32.mrb[0].mxu0
    %v157 = vadd.f32 %v39, %v156
    %v158 = vpop.f32.mrb[0].mxu0
    %159 = vmatprep.mubr.f32.mxu0 0.0
    %160 = vmatmul.mubr.f32.gmra.mrb[0].mxu0 %v60
    %v161 = vpop.f32.mrb[0].mxu0
    %v162 = vadd.f32 %v39, %v161
    %v163 = vpop.f32.mrb[0].mxu0
    %164 = vmatprep.mubr.f32.mxu0 0.0
    %165 = vmatmul.mubr.f32.gmra.mrb[0].mxu0 %v63
    %v166 = vpop.f32.mrb[0].mxu0
    %v167 = vadd.f32 %v39, %v166
    %v168 = vpop.f32.mrb[0].mxu0
    %169 = vdwg.mxu0
    %v170 = vxor.u32 %v132, 2147483648
    %v171 = vxor.u32 %v137, 2147483648
    %v172 = vxor.u32 %v142, 2147483648
    %v173 = vxor.u32 %v147, 2147483648
    %v174 = vxor.u32 %v152, 2147483648
    %v175 = vxor.u32 %v157, 2147483648
    %v176 = vxor.u32 %v162, 2147483648
    %v177 = vxor.u32 %v167, 2147483648
    %v178 = vmul.f32 %v170, 1.442695
    %v179 = vpow.pop %v178
    %v180 = vmul.f32 %v171, 1.442695
    %v181 = vpow.pop %v180
    %v182 = vmul.f32 %v172, 1.442695
    %v183 = vpow.pop %v182
    %v184 = vmul.f32 %v173, 1.442695
    %v185 = vpow.pop %v184
    %v186 = vmul.f32 %v174, 1.442695
    %v187 = vpow.pop %v186
    %v188 = vmul.f32 %v175, 1.442695
    %v189 = vpow.pop %v188
    %v190 = vmul.f32 %v176, 1.442695
    %v191 = vpow.pop %v190
    %v192 = vmul.f32 %v177, 1.442695
    %v193 = vpow.pop %v192
    %v194 = vadd.f32 %v179, 1.0
    %v195 = vadd.f32 %v181, 1.0
    %v196 = vadd.f32 %v183, 1.0
    %v197 = vadd.f32 %v185, 1.0
    %v198 = vadd.f32 %v187, 1.0
    %v199 = vadd.f32 %v189, 1.0
    %v200 = vadd.f32 %v191, 1.0
    %v201 = vadd.f32 %v193, 1.0
    %v202 = vrcp.pop %v194
    %v203 = vmul.f32 1.0, %v202
    %v204 = vrcp.pop %v195
    %v205 = vmul.f32 1.0, %v204
    %v206 = vrcp.pop %v196
    %v207 = vmul.f32 1.0, %v206
    %v208 = vrcp.pop %v197
    %v209 = vmul.f32 1.0, %v208
    %v210 = vrcp.pop %v198
    %v211 = vmul.f32 1.0, %v210
    %v212 = vrcp.pop %v199
    %v213 = vmul.f32 1.0, %v212
    %v214 = vrcp.pop %v200
    %v215 = vmul.f32 1.0, %v214
    %v216 = vrcp.pop %v201
    %v217 = vmul.f32 1.0, %v216
    %v218 = vmul.f32 %v132, %v203
    %v219 = vmul.f32 %v137, %v205
    %v220 = vmul.f32 %v142, %v207
    %v221 = vmul.f32 %v147, %v209
    %v222 = vmul.f32 %v152, %v211
    %v223 = vmul.f32 %v157, %v213
    %v224 = vmul.f32 %v162, %v215
    %v225 = vmul.f32 %v167, %v217
    %v226 = vld [vmem:[#allocation2 + $0x18] sm:$0xff]
    %v227 = vld [vmem:[#allocation2 + $0x20] sm:$0xff]
    %v228 = vld [vmem:[#allocation2 + $0x28] sm:$0xff]
    %v229 = vld [vmem:[#allocation2 + $0x30] sm:$0xff]
    %v230 = vld [vmem:[#allocation2 + $0x38] sm:$0xff]
    %v231 = vld [vmem:[#allocation2 + $0x40] sm:$0xff]
    %v232 = vld [vmem:[#allocation2 + $0x48] sm:$0xff]
    %v233 = vld [vmem:[#allocation2 + $0x50] sm:$0xff]
    %v234 = vld [vmem:[#allocation2 + $0x58] sm:$0xff]
    %v235 = vld [vmem:[#allocation2 + $0x60] sm:$0xff]
    %v236 = vld [vmem:[#allocation2 + $0x68] sm:$0xff]
    %v237 = vld [vmem:[#allocation2 + $0x70] sm:$0xff]
    %v238 = vld [vmem:[#allocation2 + $0x78] sm:$0xff]
    %v239 = vld [vmem:[#allocation2 + $0x80] sm:$0xff]
    %v240 = vld [vmem:[#allocation2 + $0x88] sm:$0xff]
    %v241 = vld [vmem:[#allocation2 + $0x90] sm:$0xff]
    %v242 = vld [vmem:[#allocation2 + $0x98] sm:$0x1]
    %v243 = vlaneseq
    %v244 = vshrl.u32 %v243, 7
    %v245 = vsub.s32 0, %v244
    %v246 = vrot.slane %v242, %v245
    %247 = vmatprep.subr.mxu0 0.0
    %248 = vmatpush1.msra.mxu0 %v226
    %249 = vmatprep.subr.mxu0 0.0
    %250 = vmatpush1.msra.mxu0 %v227
    %251 = vmatprep.subr.mxu0 0.0
    %252 = vmatpush1.msra.mxu0 %v228
    %253 = vmatprep.subr.mxu0 0.0
    %254 = vmatpush1.msra.mxu0 %v229
    %255 = vmatprep.subr.mxu0 0.0
    %256 = vmatpush1.msra.mxu0 %v230
    %257 = vmatprep.subr.mxu0 0.0
    %258 = vmatpush1.msra.mxu0 %v231
    %259 = vmatprep.subr.mxu0 0.0
    %260 = vmatpush1.msra.mxu0 %v232
    %261 = vmatprep.subr.mxu0 0.0
    %262 = vmatpush1.msra.mxu0 %v233
    %263 = vmatprep.subr.mxu0 0.0
    %264 = vmatpush1.msra.mxu0 %v234
    %265 = vmatprep.subr.mxu0 0.0
    %266 = vmatpush1.msra.mxu0 %v235
    %267 = vmatprep.subr.mxu0 0.0
    %268 = vmatpush1.msra.mxu0 %v236
    %269 = vmatprep.subr.mxu0 0.0
    %270 = vmatpush1.msra.mxu0 %v237
    %271 = vmatprep.subr.mxu0 0.0
    %272 = vmatpush1.msra.mxu0 %v238
    %273 = vmatprep.subr.mxu0 0.0
    %274 = vmatpush1.msra.mxu0 %v239
    %275 = vmatprep.subr.mxu0 0.0
    %276 = vmatpush1.msra.mxu0 %v240
    %277 = vmatprep.subr.mxu0 0.0
    %278 = vmatpush1.msra.mxu0 %v241
    %279 = vmatprep.subr.mxu0 0.0
    %280 = vmatpush1.msra.mxu0 0.0
    %281 = vmatprep.subr.mxu0 0.0
    %282 = vmatpush1.msra.mxu0 0.0
    %283 = vmatprep.subr.mxu0 0.0
    %284 = vmatpush1.msra.mxu0 0.0
    %285 = vmatprep.subr.mxu0 0.0
    %286 = vmatpush1.msra.mxu0 0.0
    %287 = vmatprep.subr.mxu0 0.0
    %288 = vmatpush1.msra.mxu0 0.0
    %289 = vmatprep.subr.mxu0 0.0
    %290 = vmatpush1.msra.mxu0 0.0
    %291 = vmatprep.subr.mxu0 0.0
    %292 = vmatpush1.msra.mxu0 0.0
    %293 = vmatprep.subr.mxu0 0.0
    %294 = vmatpush1.msra.mxu0 0.0
    %295 = vmatprep.subr.mxu0 0.0
    %296 = vmatpush1.msra.mxu0 0.0
    %297 = vmatprep.subr.mxu0 0.0
    %298 = vmatpush1.msra.mxu0 0.0
    %299 = vmatprep.subr.mxu0 0.0
    %300 = vmatpush1.msra.mxu0 0.0
    %301 = vmatprep.subr.mxu0 0.0
    %302 = vmatpush1.msra.mxu0 0.0
    %303 = vmatprep.subr.mxu0 0.0
    %304 = vmatpush1.msra.mxu0 0.0
    %305 = vmatprep.subr.mxu0 0.0
    %306 = vmatpush1.msra.mxu0 0.0
    %307 = vmatprep.subr.mxu0 0.0
    %308 = vmatpush1.msra.mxu0 0.0
    %309 = vmatprep.subr.mxu0 0.0
    %310 = vmatpush1.msra.mxu0 0.0
    %311 = vmatprep.mubr.f32.mxu0 0.0
    %312 = vmatmul.mubr.f32.gmra.mrb[0].mxu0 %v218
    %v313 = vpop.f32.mrb[0].mxu0
    %v314 = vadd.f32 %v246, %v313
    %v315 = vpop.f32.mrb[0].mxu0
    %316 = vmatprep.mubr.f32.mxu0 0.0
    %317 = vmatmul.mubr.f32.gmra.mrb[0].mxu0 %v219
    %v318 = vpop.f32.mrb[0].mxu0
    %v319 = vadd.f32 %v246, %v318
    %v320 = vpop.f32.mrb[0].mxu0
    %321 = vmatprep.mubr.f32.mxu0 0.0
    %322 = vmatmul.mubr.f32.gmra.mrb[0].mxu0 %v220
    %v323 = vpop.f32.mrb[0].mxu0
    %v324 = vadd.f32 %v246, %v323
    %v325 = vpop.f32.mrb[0].mxu0
    %326 = vmatprep.mubr.f32.mxu0 0.0
    %327 = vmatmul.mubr.f32.gmra.mrb[0].mxu0 %v221
    %v328 = vpop.f32.mrb[0].mxu0
    %v329 = vadd.f32 %v246, %v328
    %v330 = vpop.f32.mrb[0].mxu0
    %331 = vmatprep.mubr.f32.mxu0 0.0
    %332 = vmatmul.mubr.f32.gmra.mrb[0].mxu0 %v222
    %v333 = vpop.f32.mrb[0].mxu0
    %v334 = vadd.f32 %v246, %v333
    %v335 = vpop.f32.mrb[0].mxu0
    %336 = vmatprep.mubr.f32.mxu0 0.0
    %337 = vmatmul.mubr.f32.gmra.mrb[0].mxu0 %v223
    %v338 = vpop.f32.mrb[0].mxu0
    %v339 = vadd.f32 %v246, %v338
    %v340 = vpop.f32.mrb[0].mxu0
    %341 = vmatprep.mubr.f32.mxu0 0.0
    %342 = vmatmul.mubr.f32.gmra.mrb[0].mxu0 %v224
    %v343 = vpop.f32.mrb[0].mxu0
    %v344 = vadd.f32 %v246, %v343
    %v345 = vpop.f32.mrb[0].mxu0
    %346 = vmatprep.mubr.f32.mxu0 0.0
    %347 = vmatmul.mubr.f32.gmra.mrb[0].mxu0 %v225
    %v348 = vpop.f32.mrb[0].mxu0
    %v349 = vadd.f32 %v246, %v348
    %v350 = vpop.f32.mrb[0].mxu0
    %351 = vdwg.mxu0
    %v352 = vxor.u32 %v314, 2147483648
    %v353 = vxor.u32 %v319, 2147483648
    %v354 = vxor.u32 %v324, 2147483648
    %v355 = vxor.u32 %v329, 2147483648
    %v356 = vxor.u32 %v334, 2147483648
    %v357 = vxor.u32 %v339, 2147483648
    %v358 = vxor.u32 %v344, 2147483648
    %v359 = vxor.u32 %v349, 2147483648
    %v360 = vmul.f32 %v352, 1.442695
    %v361 = vpow.pop %v360
    %v362 = vmul.f32 %v353, 1.442695
    %v363 = vpow.pop %v362
    %v364 = vmul.f32 %v354, 1.442695
    %v365 = vpow.pop %v364
    %v366 = vmul.f32 %v355, 1.442695
    %v367 = vpow.pop %v366
    %v368 = vmul.f32 %v356, 1.442695
    %v369 = vpow.pop %v368
    %v370 = vmul.f32 %v357, 1.442695
    %v371 = vpow.pop %v370
    %v372 = vmul.f32 %v358, 1.442695
    %v373 = vpow.pop %v372
    %v374 = vmul.f32 %v359, 1.442695
    %v375 = vpow.pop %v374
    %v376 = vadd.f32 %v361, 1.0
    %v377 = vadd.f32 %v363, 1.0
    %v378 = vadd.f32 %v365, 1.0
    %v379 = vadd.f32 %v367, 1.0
    %v380 = vadd.f32 %v369, 1.0
    %v381 = vadd.f32 %v371, 1.0
    %v382 = vadd.f32 %v373, 1.0
    %v383 = vadd.f32 %v375, 1.0
    %v384 = vrcp.pop %v376
    %v385 = vmul.f32 1.0, %v384
    %v386 = vrcp.pop %v377
    %v387 = vmul.f32 1.0, %v386
    %v388 = vrcp.pop %v378
    %v389 = vmul.f32 1.0, %v388
    %v390 = vrcp.pop %v379
    %v391 = vmul.f32 1.0, %v390
    %v392 = vrcp.pop %v380
    %v393 = vmul.f32 1.0, %v392
    %v394 = vrcp.pop %v381
    %v395 = vmul.f32 1.0, %v394
    %v396 = vrcp.pop %v382
    %v397 = vmul.f32 1.0, %v396
    %v398 = vrcp.pop %v383
    %v399 = vmul.f32 1.0, %v398
    %v400 = vmul.f32 %v314, %v385
    %v401 = vmul.f32 %v319, %v387
    %v402 = vmul.f32 %v324, %v389
    %v403 = vmul.f32 %v329, %v391
    %v404 = vmul.f32 %v334, %v393
    %v405 = vmul.f32 %v339, %v395
    %v406 = vmul.f32 %v344, %v397
    %v407 = vmul.f32 %v349, %v399
    %v408 = vld [vmem:[#allocation2 + $0xa0] sm:$0xff]
    %v409 = vld [vmem:[#allocation2 + $0xa8] sm:$0xff]
    %v410 = vld [vmem:[#allocation2 + $0xb0] sm:$0xff]
    %v411 = vld [vmem:[#allocation2 + $0xb8] sm:$0xff]
    %v412 = vld [vmem:[#allocation2 + $0xc0] sm:$0xff]
    %v413 = vld [vmem:[#allocation2 + $0xc8] sm:$0xff]
    %v414 = vld [vmem:[#allocation2 + $0xd0] sm:$0xff]
    %v415 = vld [vmem:[#allocation2 + $0xd8] sm:$0xff]
    %v416 = vld [vmem:[#allocation2 + $0xe0] sm:$0xff]
    %v417 = vld [vmem:[#allocation2 + $0xe8] sm:$0xff]
    %v418 = vld [vmem:[#allocation2 + $0xf0] sm:$0xff]
    %v419 = vld [vmem:[#allocation2 + $0xf8] sm:$0xff]
    %v420 = vld [vmem:[#allocation2 + $0x100] sm:$0xff]
    %v421 = vld [vmem:[#allocation2 + $0x108] sm:$0xff]
    %v422 = vld [vmem:[#allocation2 + $0x110] sm:$0xff]
    %v423 = vld [vmem:[#allocation2 + $0x118] sm:$0xff]
    %v424 = vld [vmem:[#allocation2 + $0x120] sm:$0x1]
    %v425 = vlaneseq
    %v426 = vshrl.u32 %v425, 7
    %v427 = vsub.s32 0, %v426
    %v428 = vrot.slane %v424, %v427
    %429 = vmatprep.subr.mxu0 0.0
    %430 = vmatpush1.msra.mxu0 %v408
    %431 = vmatprep.subr.mxu0 0.0
    %432 = vmatpush1.msra.mxu0 %v409
    %433 = vmatprep.subr.mxu0 0.0
    %434 = vmatpush1.msra.mxu0 %v410
    %435 = vmatprep.subr.mxu0 0.0
    %436 = vmatpush1.msra.mxu0 %v411
    %437 = vmatprep.subr.mxu0 0.0
    %438 = vmatpush1.msra.mxu0 %v412
    %439 = vmatprep.subr.mxu0 0.0
    %440 = vmatpush1.msra.mxu0 %v413
    %441 = vmatprep.subr.mxu0 0.0
    %442 = vmatpush1.msra.mxu0 %v414
    %443 = vmatprep.subr.mxu0 0.0
    %444 = vmatpush1.msra.mxu0 %v415
    %445 = vmatprep.subr.mxu0 0.0
    %446 = vmatpush1.msra.mxu0 %v416
    %447 = vmatprep.subr.mxu0 0.0
    %448 = vmatpush1.msra.mxu0 %v417
    %449 = vmatprep.subr.mxu0 0.0
    %450 = vmatpush1.msra.mxu0 %v418
    %451 = vmatprep.subr.mxu0 0.0
    %452 = vmatpush1.msra.mxu0 %v419
    %453 = vmatprep.subr.mxu0 0.0
    %454 = vmatpush1.msra.mxu0 %v420
    %455 = vmatprep.subr.mxu0 0.0
    %456 = vmatpush1.msra.mxu0 %v421
    %457 = vmatprep.subr.mxu0 0.0
    %458 = vmatpush1.msra.mxu0 %v422
    %459 = vmatprep.subr.mxu0 0.0
    %460 = vmatpush1.msra.mxu0 %v423
    %461 = vmatprep.subr.mxu0 0.0
    %462 = vmatpush1.msra.mxu0 0.0
    %463 = vmatprep.subr.mxu0 0.0
    %464 = vmatpush1.msra.mxu0 0.0
    %465 = vmatprep.subr.mxu0 0.0
    %466 = vmatpush1.msra.mxu0 0.0
    %467 = vmatprep.subr.mxu0 0.0
    %468 = vmatpush1.msra.mxu0 0.0
    %469 = vmatprep.subr.mxu0 0.0
    %470 = vmatpush1.msra.mxu0 0.0
    %471 = vmatprep.subr.mxu0 0.0
    %472 = vmatpush1.msra.mxu0 0.0
    %473 = vmatprep.subr.mxu0 0.0
    %474 = vmatpush1.msra.mxu0 0.0
    %475 = vmatprep.subr.mxu0 0.0
    %476 = vmatpush1.msra.mxu0 0.0
    %477 = vmatprep.subr.mxu0 0.0
    %478 = vmatpush1.msra.mxu0 0.0
    %479 = vmatprep.subr.mxu0 0.0
    %480 = vmatpush1.msra.mxu0 0.0
    %481 = vmatprep.subr.mxu0 0.0
    %482 = vmatpush1.msra.mxu0 0.0
    %483 = vmatprep.subr.mxu0 0.0
    %484 = vmatpush1.msra.mxu0 0.0
    %485 = vmatprep.subr.mxu0 0.0
    %486 = vmatpush1.msra.mxu0 0.0
    %487 = vmatprep.subr.mxu0 0.0
    %488 = vmatpush1.msra.mxu0 0.0
    %489 = vmatprep.subr.mxu0 0.0
    %490 = vmatpush1.msra.mxu0 0.0
    %491 = vmatprep.subr.mxu0 0.0
    %492 = vmatpush1.msra.mxu0 0.0
    %493 = vmatprep.mubr.f32.mxu0 0.0
    %494 = vmatmul.mubr.f32.gmra.mrb[0].mxu0 %v400
    %v495 = vpop.f32.mrb[0].mxu0
    %v496 = vadd.f32 %v428, %v495
    %v497 = vpop.f32.mrb[0].mxu0
    %498 = vmatprep.mubr.f32.mxu0 0.0
    %499 = vmatmul.mubr.f32.gmra.mrb[0].mxu0 %v401
    %v500 = vpop.f32.mrb[0].mxu0
    %v501 = vadd.f32 %v428, %v500
    %v502 = vpop.f32.mrb[0].mxu0
    %503 = vmatprep.mubr.f32.mxu0 0.0
    %504 = vmatmul.mubr.f32.gmra.mrb[0].mxu0 %v402
    %v505 = vpop.f32.mrb[0].mxu0
    %v506 = vadd.f32 %v428, %v505
    %v507 = vpop.f32.mrb[0].mxu0
    %508 = vmatprep.mubr.f32.mxu0 0.0
    %509 = vmatmul.mubr.f32.gmra.mrb[0].mxu0 %v403
    %v510 = vpop.f32.mrb[0].mxu0
    %v511 = vadd.f32 %v428, %v510
    %v512 = vpop.f32.mrb[0].mxu0
    %513 = vmatprep.mubr.f32.mxu0 0.0
    %514 = vmatmul.mubr.f32.gmra.mrb[0].mxu0 %v404
    %v515 = vpop.f32.mrb[0].mxu0
    %v516 = vadd.f32 %v428, %v515
    %v517 = vpop.f32.mrb[0].mxu0
    %518 = vmatprep.mubr.f32.mxu0 0.0
    %519 = vmatmul.mubr.f32.gmra.mrb[0].mxu0 %v405
    %v520 = vpop.f32.mrb[0].mxu0
    %v521 = vadd.f32 %v428, %v520
    %v522 = vpop.f32.mrb[0].mxu0
    %523 = vmatprep.mubr.f32.mxu0 0.0
    %524 = vmatmul.mubr.f32.gmra.mrb[0].mxu0 %v406
    %v525 = vpop.f32.mrb[0].mxu0
    %v526 = vadd.f32 %v428, %v525
    %v527 = vpop.f32.mrb[0].mxu0
    %528 = vmatprep.mubr.f32.mxu0 0.0
    %529 = vmatmul.mubr.f32.gmra.mrb[0].mxu0 %v407
    %v530 = vpop.f32.mrb[0].mxu0
    %v531 = vadd.f32 %v428, %v530
    %v532 = vpop.f32.mrb[0].mxu0
    %533 = vdwg.mxu0
    %v534 = vtanh.pop %v496
    %v535 = vtanh.pop %v501
    %v536 = vtanh.pop %v506
    %v537 = vtanh.pop %v511
    %v538 = vtanh.pop %v516
    %v539 = vtanh.pop %v521
    %v540 = vtanh.pop %v526
    %v541 = vtanh.pop %v531
    %542 = vst [vmem:[%s2] sm:$0xff] %v534
    %543 = vst [vmem:[%s2 + $0x8] sm:$0xff] %v535
    %544 = vst [vmem:[%s2 + $0x10] sm:$0xff] %v536
    %545 = vst [vmem:[%s2 + $0x18] sm:$0xff] %v537
    %546 = vst [vmem:[%s2 + $0x20] sm:$0xff] %v538
    %547 = vst [vmem:[%s2 + $0x28] sm:$0xff] %v539
    %548 = vst [vmem:[%s2 + $0x30] sm:$0xff] %v540
    %549 = vst [vmem:[%s2 + $0x38] sm:$0xff] %v541
    // Predicated region
    $region14: #{mlp_forward.1} parent=1 // pred_check
      _
    $region15: #{mlp_forward.1} parent=1 // pred_check_branch
      %551 = sbr.rel (0) target = $region17
    $region16: #{mlp_forward.1} parent=1 // pred_region
      _
    $region17: #{mlp_forward.1} parent=1 // pred_fallthru
      _
    // Predicated region
    $region18: #{mlp_forward.1} parent=1 // pred_check
      _
    $region19: #{mlp_forward.1} parent=1 // pred_check_branch
      %553 = sbr.rel (0) target = $region21
    $region20: #{mlp_forward.1} parent=1 // pred_region
      _
    $region21: #{mlp_forward.1} parent=1 // pred_fallthru
      _
    %554 = vsyncpa [#allocation3], 1

</llo_original>
